<compile_context>
chip_gen: v6e
topology: v6e:2x2x1
jax: 0.10.0
libtpu: 0.0.40
codegen_flags: <defaults>
</compile_context>

<pallas_src>
import jax
import jax.numpy as jnp
from jax.experimental import pallas as pl
from jax.experimental.pallas import tpu as pltpu

LEAKY_SLOPE = 0.2


def fc_block_kernel(scale_ref, x_ref, w_ref, b_ref, o_ref):
    # scale_ref: SMEM scalar (weight-norm scale, precomputed in wrapper).
    scale = scale_ref[0]

    # MXU matmul in bf16 with f32 accumulation; weight is already (in, out).
    x = x_ref[...].astype(jnp.bfloat16)
    w = w_ref[...].astype(jnp.bfloat16)
    y = jnp.dot(x, w, preferred_element_type=jnp.float32)      # (TB, TN)

    # Epilogue in f32: weight-norm scale on the matmul result, bias, LeakyReLU.
    y = y * scale + b_ref[...]
    y = jnp.where(y > 0, y, LEAKY_SLOPE * y)

    # Dropout(p=0.5): inference mode -> identity.
    # TODO(synk): training-mode dropout would use pltpu.prng_seed + stateful_bernoulli.
    o_ref[...] = y.astype(o_ref.dtype)


def _round_up(x, m):
    return (x + m - 1) // m * m


def fc_block(x, weight_v, weight_g, bias, *, tb=128, tn=128):
    B, in_f = x.shape
    out_f, _ = weight_v.shape

    # Hoisted weight-norm scale: scalar g * rsqrt(sum(v^2)) — weights-only work.
    v32 = weight_v.astype(jnp.float32)
    scale = (weight_g.astype(jnp.float32) * jax.lax.rsqrt(jnp.sum(v32 * v32)))
    scale = jnp.reshape(scale, (1,))

    # Pad feature dims to 128 lanes; batch to the sublane tile.
    in_p = _round_up(in_f, 128)
    out_p = _round_up(out_f, 128)
    tb = min(tb, _round_up(B, 8))
    b_p = _round_up(B, tb)
    tn = min(tn, out_p)

    x_p = jnp.pad(x, ((0, b_p - B), (0, in_p - in_f)))
    w_t = jnp.pad(weight_v.T, ((0, in_p - in_f), (0, out_p - out_f)))   # (in_p, out_p)
    b2d = jnp.pad(bias.reshape(1, out_f), ((0, 0), (0, out_p - out_f)))

    grid = (b_p // tb, out_p // tn)

    out = pl.pallas_call(
        fc_block_kernel,
        out_shape=jax.ShapeDtypeStruct((b_p, out_p), x.dtype),
        grid_spec=pltpu.PrefetchScalarGridSpec(
            num_scalar_prefetch=1,
            grid=grid,
            in_specs=[
                pl.BlockSpec((tb, in_p), lambda i, j, s: (i, 0)),   # x tile
                pl.BlockSpec((in_p, tn), lambda i, j, s: (0, j)),   # weight tile (N-tiled)
                pl.BlockSpec((1, tn), lambda i, j, s: (0, j)),      # bias tile
            ],
            out_specs=pl.BlockSpec((tb, tn), lambda i, j, s: (i, j)),
        ),
        compiler_params=pltpu.CompilerParams(
            dimension_semantics=("parallel", "parallel")),
    )(scale, x_p, w_t, b2d)

    return out[:B, :out_f]


if __name__ == "__main__":
    key = jax.random.PRNGKey(0)
    kx, kw, kb = jax.random.split(key, 3)

    B, in_features, out_features = 8, 32, 64

    x = jax.random.normal(kx, (B, in_features), dtype=jnp.float32)

    # Deterministic parameter init mimicking nn.Linear + WeightNorm._reset:
    # raw weight w0 ~ U(-1/sqrt(in), 1/sqrt(in)); g = ||w0||; v = w0 / g.
    bound = 1.0 / jnp.sqrt(jnp.float32(in_features))
    w0 = jax.random.uniform(kw, (out_features, in_features),
                            minval=-bound, maxval=bound, dtype=jnp.float32)
    g = jnp.sqrt(jnp.sum(w0 * w0))
    v = w0 / g
    bias = jax.random.uniform(kb, (out_features,),
                              minval=-bound, maxval=bound, dtype=jnp.float32)

    out = fc_block(x, v, g, bias)
    out = jax.block_until_ready(out)

    # Reference check in plain f32 JAX (kernel matmul is bf16 -> loose tolerance).
    w_ref = v * (g / jnp.sqrt(jnp.sum(v * v)))
    y_ref = x @ w_ref.T + bias
    y_ref = jnp.where(y_ref > 0, y_ref, LEAKY_SLOPE * y_ref)
    assert out.shape == y_ref.shape
    assert jnp.allclose(out, y_ref, atol=2e-2, rtol=2e-2), (
        float(jnp.max(jnp.abs(out - y_ref))))

    print("KERNEL_OK")
</pallas_src>

<mosaic_0001>
module attributes {stable_mosaic.version = 11 : i64} {
  func.func @fc_block_kernel(%arg0: i32, %arg1: i32, %arg2: memref<1xf32, #tpu.memory_space<smem>>, %arg3: memref<8x128xf32, #tpu.memory_space<vmem>>, %arg4: memref<128x128xf32, #tpu.memory_space<vmem>>, %arg5: memref<1x128xf32, #tpu.memory_space<vmem>>, %arg6: memref<8x128xf32, #tpu.memory_space<vmem>>) attributes {dimension_semantics = [#tpu.dimension_semantics<parallel>, #tpu.dimension_semantics<parallel>], iteration_bounds = array<i64: 1, 1>, scalar_prefetch = 1 : i64, scratch_operands = 0 : i64, tpu.core_type = #tpu.core_type<tc>, window_params = [{transform_indices = @transform_0, window_bounds = array<i64: 8, 128>}, {transform_indices = @transform_1, window_bounds = array<i64: 128, 128>}, {transform_indices = @transform_2, window_bounds = array<i64: 1, 128>}, {transform_indices = @transform_3, window_bounds = array<i64: 8, 128>}]} {
    %c0 = arith.constant 0 : index
    %0 = memref.load %arg2[%c0] : memref<1xf32, #tpu.memory_space<smem>>
    %c0_0 = arith.constant 0 : index
    %c0_1 = arith.constant 0 : index
    %1 = vector.load %arg3[%c0_0, %c0_1] : memref<8x128xf32, #tpu.memory_space<vmem>>, vector<8x128xf32>
    %2 = arith.truncf %1 : vector<8x128xf32> to vector<8x128xbf16>
    %c0_2 = arith.constant 0 : index
    %c0_3 = arith.constant 0 : index
    %3 = vector.load %arg4[%c0_2, %c0_3] : memref<128x128xf32, #tpu.memory_space<vmem>>, vector<128x128xf32>
    %4 = arith.truncf %3 : vector<128x128xf32> to vector<128x128xbf16>
    %cst = arith.constant dense<0.000000e+00> : vector<8x128xf32>
    %5 = tpu.matmul %2, %4, %cst {dimension_numbers = #tpu.dot_dimension_numbers<[1], [0], [0], [1], [0, 0, 1, 1], [], []>} : vector<8x128xbf16>, vector<128x128xbf16>, vector<8x128xf32> -> vector<8x128xf32>
    %6 = vector.broadcast %0 : f32 to vector<8x128xf32>
    %7 = arith.mulf %5, %6 : vector<8x128xf32>
    %c0_4 = arith.constant 0 : index
    %c0_5 = arith.constant 0 : index
    %8 = vector.load %arg5[%c0_4, %c0_5] : memref<1x128xf32, #tpu.memory_space<vmem>>, vector<1x128xf32>
    %9 = vector.broadcast %8 : vector<1x128xf32> to vector<8x128xf32>
    %10 = arith.addf %7, %9 : vector<8x128xf32>
    %cst_6 = arith.constant 0.000000e+00 : f32
    %11 = vector.broadcast %cst_6 : f32 to vector<8x128xf32>
    %12 = arith.cmpf ogt, %10, %11 : vector<8x128xf32>
    %cst_7 = arith.constant 2.000000e-01 : f32
    %13 = vector.broadcast %cst_7 : f32 to vector<8x128xf32>
    %14 = arith.mulf %13, %10 : vector<8x128xf32>
    %15 = arith.select %12, %10, %14 : vector<8x128xi1>, vector<8x128xf32>
    %c0_8 = arith.constant 0 : index
    %c0_9 = arith.constant 0 : index
    %16 = vector.load %arg6[%c0_8, %c0_9] : memref<8x128xf32, #tpu.memory_space<vmem>>, vector<8x128xf32>
    tpu.vector_store %arg6[%c0_8, %c0_9], %15 {strides = array<i32>} : memref<8x128xf32, #tpu.memory_space<vmem>>, vector<8x128xf32>,
    return
  }
  func.func @transform_0(%arg0: i32, %arg1: i32, %arg2: memref<1xf32, #tpu.memory_space<smem>>) -> (i32, i32) {
    %c0_i32 = arith.constant 0 : i32
    %c0_i32_0 = arith.constant 0 : i32
    return %arg0, %c0_i32 : i32, i32
  }
  func.func @transform_1(%arg0: i32, %arg1: i32, %arg2: memref<1xf32, #tpu.memory_space<smem>>) -> (i32, i32) {
    %c0_i32 = arith.constant 0 : i32
    %c0_i32_0 = arith.constant 0 : i32
    return %c0_i32, %arg1 : i32, i32
  }
  func.func @transform_2(%arg0: i32, %arg1: i32, %arg2: memref<1xf32, #tpu.memory_space<smem>>) -> (i32, i32) {
    %c0_i32 = arith.constant 0 : i32
    %c0_i32_0 = arith.constant 0 : i32
    return %c0_i32, %arg1 : i32, i32
  }
  func.func @transform_3(%arg0: i32, %arg1: i32, %arg2: memref<1xf32, #tpu.memory_space<smem>>) -> (i32, i32) {
    %c0_i32 = arith.constant 0 : i32
    return %arg0, %arg1 : i32, i32
  }
}

</mosaic_0001>

<llo_original>
// kernel: tpu_custom_call.1
$region0: #{tpu_custom_call.1}
  #allocation0 [shape = 'u32[]', space=smem, size = 0x4, offset = 0x4, fixed_abs, tag = 'smem constant byte address 0x4 - core index']
  #allocation1 [shape = 'u32[144,128]{1,0:T(1,128)}', space=vmem, size = 0x12000, scoped, tag = 'internal scratch']
  #allocation2 [shape = 's32[1]{0}', space=sflag, size = 0x4, scoped, tag = 'scoped memory for tpu_custom_call.1']
  #allocation3 [shape = 'f32[1]{0:T(128)S(6)}', space=smem, size = 0x200, scoped, tag = 'prefetched SMEM operand 0']
  %s0 = inlined_call_operand.<no memory space> [shape: f32[1], index: 0, kind: input, shape index: {}]
  %s1 = inlined_call_operand.hbm [shape: f32[8,128], index: 1, kind: input, shape index: {}]
  %s2 = inlined_call_operand.hbm [shape: f32[128,128], index: 2, kind: input, shape index: {}]
  %s3 = inlined_call_operand.vmem [shape: f32[1,128], index: 3, kind: input, shape index: {}]
  %s4 = inlined_call_operand.hbm [shape: f32[8,128], index: 4, kind: output, shape index: {}]
  %s5 = sld [smem:[#allocation0]]
  $region30: #{tpu_custom_call.1} parent=0
    _
  %s7 = ssub.s32 1, %s5
  %s8 = scalar_select 0, %s7, %s5
  %9 = sst [smem:[#allocation3]] %s0
  $region1: #{tpu_custom_call.1} parent=0
    #allocation4 [shape = 'u8[4096]{0}', space=vmem, size = 0x1000, scoped, tag = 'input window, operand 1, single buffered']
    #allocation5 [shape = 's32[1]{0}', space=sflag, size = 0x4, scoped, tag = 'scoped memory for tpu_custom_call.1']
    #allocation6 [shape = 's32[1]{0}', space=sflag, size = 0x4, scoped, tag = 'scoped memory for tpu_custom_call.1']
    #allocation7 [shape = 'u8[65536]{0}', space=vmem, size = 0x10000, scoped, tag = 'input window, operand 2, single buffered']
    #allocation8 [shape = 's32[1]{0}', space=sflag, size = 0x4, scoped, tag = 'scoped memory for tpu_custom_call.1']
    #allocation9 [shape = 'u8[4096]{0}', space=vmem, size = 0x1000, scoped, tag = 'output window, operand 0, single buffered']
    %10 = vsyncpa [#allocation5], 0
    %11 = vsyncpa [#allocation8], 0
    %12 = vsyncpa [#allocation6], 0
    // Predicated region
    $region2: #{tpu_custom_call.1} parent=1 // pred_check
      _
    $region3: #{tpu_custom_call.1} parent=1 // pred_check_branch
      %14 = sbr.rel (0) target = $region5
    $region4: #{tpu_custom_call.1} parent=1 // pred_region
      %s16 = ssub.s32 128, 128
      %17 = vsyncadd [#allocation5], %s16
      %s19 = sshll.u32 [#allocation4], 4
      %s20 = int_to_ptr.vmem [resolvable:$true] %s19
      %22 = dma.hbm_to_vmem [thread:$0]  %s1, 128, %s20, [#allocation5]
    $region5: #{tpu_custom_call.1} parent=1 // pred_fallthru
      _
    // Predicated region
    $region6: #{tpu_custom_call.1} parent=1 // pred_check
      _
    $region7: #{tpu_custom_call.1} parent=1 // pred_check_branch
      %24 = sbr.rel (0) target = $region9
    $region8: #{tpu_custom_call.1} parent=1 // pred_region
      %s26 = ssub.s32 2048, 2048
      %27 = vsyncadd [#allocation8], %s26
      %s28 = sshll.u32 [#allocation7], 4
      %s29 = int_to_ptr.vmem [resolvable:$true] %s28
      %34 = dma.hbm_to_vmem [thread:$0]  %s2, 2048, %s29, [#allocation8], 128, 128, 8
    $region9: #{tpu_custom_call.1} parent=1 // pred_fallthru
      _
    // Predicated region
    $region10: #{tpu_custom_call.1} parent=1 // pred_check
      _
    $region11: #{tpu_custom_call.1} parent=1 // pred_check_branch
      %36 = sbr.rel (0) target = $region13
    $region12: #{tpu_custom_call.1} parent=1 // pred_region
      _
    $region13: #{tpu_custom_call.1} parent=1 // pred_fallthru
      _
    // Predicated region
    $region14: #{tpu_custom_call.1} parent=1 // pred_check
      _
    $region15: #{tpu_custom_call.1} parent=1 // pred_check_branch
      %38 = sbr.rel (0) target = $region17
    $region16: #{tpu_custom_call.1} parent=1 // pred_region
      %39 = dma.done [#allocation5], 128
    $region17: #{tpu_custom_call.1} parent=1 // pred_fallthru
      _
    // Predicated region
    $region18: #{tpu_custom_call.1} parent=1 // pred_check
      _
    $region19: #{tpu_custom_call.1} parent=1 // pred_check_branch
      %41 = sbr.rel (0) target = $region21
    $region20: #{tpu_custom_call.1} parent=1 // pred_region
      %42 = dma.done [#allocation8], 2048
    $region21: #{tpu_custom_call.1} parent=1 // pred_fallthru
      _
    %s44 = sld [smem:[#allocation3]]
    %v45 = vld [vmem:[#allocation4] sm:$0xff]
    %v46 = vpack.c.bf16 %v45, %v45
    %v47 = vld [vmem:[#allocation7] sm:$0xff]
    %v48 = vld [vmem:[#allocation7 + $0x8] sm:$0xff]
    %v49 = vld [vmem:[#allocation7 + $0x10] sm:$0xff]
    %v50 = vld [vmem:[#allocation7 + $0x18] sm:$0xff]
    %v51 = vld [vmem:[#allocation7 + $0x20] sm:$0xff]
    %v52 = vld [vmem:[#allocation7 + $0x28] sm:$0xff]
    %v53 = vld [vmem:[#allocation7 + $0x30] sm:$0xff]
    %v54 = vld [vmem:[#allocation7 + $0x38] sm:$0xff]
    %v55 = vld [vmem:[#allocation7 + $0x40] sm:$0xff]
    %v56 = vld [vmem:[#allocation7 + $0x48] sm:$0xff]
    %v57 = vld [vmem:[#allocation7 + $0x50] sm:$0xff]
    %v58 = vld [vmem:[#allocation7 + $0x58] sm:$0xff]
    %v59 = vld [vmem:[#allocation7 + $0x60] sm:$0xff]
    %v60 = vld [vmem:[#allocation7 + $0x68] sm:$0xff]
    %v61 = vld [vmem:[#allocation7 + $0x70] sm:$0xff]
    %v62 = vld [vmem:[#allocation7 + $0x78] sm:$0xff]
    %v63 = vpack.c.bf16 %v48, %v47
    %v64 = vpack.c.bf16 %v50, %v49
    %v65 = vpack.c.bf16 %v52, %v51
    %v66 = vpack.c.bf16 %v54, %v53
    %v67 = vpack.c.bf16 %v56, %v55
    %v68 = vpack.c.bf16 %v58, %v57
    %v69 = vpack.c.bf16 %v60, %v59
    %v70 = vpack.c.bf16 %v62, %v61
    %71 = vmatprep.subr.bf16.mxu0 0
    %72 = vmatpush1.bf16.msra.mxu0 %v70
    %73 = vmatprep.subr.bf16.mxu0 0
    %74 = vmatpush1.bf16.msra.mxu0 %v69
    %75 = vmatprep.subr.bf16.mxu0 0
    %76 = vmatpush1.bf16.msra.mxu0 %v68
    %77 = vmatprep.subr.bf16.mxu0 0
    %78 = vmatpush1.bf16.msra.mxu0 %v67
    %79 = vmatprep.subr.bf16.mxu0 0
    %80 = vmatpush1.bf16.msra.mxu0 %v66
    %81 = vmatprep.subr.bf16.mxu0 0
    %82 = vmatpush1.bf16.msra.mxu0 %v65
    %83 = vmatprep.subr.bf16.mxu0 0
    %84 = vmatpush1.bf16.msra.mxu0 %v64
    %85 = vmatprep.subr.bf16.mxu0 0
    %86 = vmatpush1.bf16.msra.mxu0 %v63
    %87 = vmatprep.subr.bf16.mxu0 0
    %88 = vmatpush2.bf16.msra.mxu0 0
    %89 = vmatprep.subr.bf16.mxu0 0
    %90 = vmatpush2.bf16.msra.mxu0 0
    %91 = vmatprep.subr.bf16.mxu0 0
    %92 = vmatpush2.bf16.msra.mxu0 0
    %93 = vmatprep.subr.bf16.mxu0 0
    %94 = vmatpush2.bf16.msra.mxu0 0
    %95 = vmatprep.subr.bf16.mxu0 0
    %96 = vmatpush2.bf16.msra.mxu0 0
    %97 = vmatprep.subr.bf16.mxu0 0
    %98 = vmatpush2.bf16.msra.mxu0 0
    %99 = vmatprep.subr.bf16.mxu0 0
    %100 = vmatpush2.bf16.msra.mxu0 0
    %101 = vmatprep.subr.bf16.mxu0 0
    %102 = vmatpush2.bf16.msra.mxu0 0
    %103 = vmatprep.mubr.bf16.mxu0 0
    %104 = vmatmul.mubr.bf16.gmra.mxu0 %v46
    %v105 = vpop.f32.mrf.mxu0
    %v106 = vadd.f32 0.0, %v105
    %v107 = vpop.f32.mrf.mxu0
    %v108 = vpop.f32.mrf.mxu0
    %v109 = vpop.f32.mrf.mxu0
    %110 = vdwg.mxu0
    %v111 = vstv %s44
    %v112 = vmul.f32 %v106, %v111
    %v113 = vld [vmem:[%s3] sm:$0x1]
    %v115 = vlaneseq
    %v116 = vshrl.u32 %v115, 7
    %v117 = vsub.s32 0, %v116
    %v118 = vrot.slane %v113, %v117
    %v120 = vadd.f32 %v112, %v118
    %vm121 = vcmp.gt.f32.partialorder %v120, 0.0
    %v122 = vmul.f32 %v120, 0.2
    %v123 = vsel %vm121, %v120, %v122
    %124 = vst [vmem:[#allocation9] sm:$0xff] %v123
    // Predicated region
    $region22: #{tpu_custom_call.1} parent=1 // pred_check
      _
    $region23: #{tpu_custom_call.1} parent=1 // pred_check_branch
      %126 = sbr.rel (0) target = $region25
    $region24: #{tpu_custom_call.1} parent=1 // pred_region
      %s128 = ssub.s32 128, 128
      %129 = vsyncadd [#allocation6], %s128
      %s131 = sshll.u32 [#allocation9], 4
      %s132 = int_to_ptr.vmem [resolvable:$true] %s131
      %134 = dma.vmem_to_hbm [thread:$0]  %s132, 128, %s4, [#allocation6]
    $region25: #{tpu_custom_call.1} parent=1 // pred_fallthru
      _
    // Predicated region
    $region26: #{tpu_custom_call.1} parent=1 // pred_check
      _
    $region27: #{tpu_custom_call.1} parent=1 // pred_check_branch
      %136 = sbr.rel (0) target = $region29
    $region28: #{tpu_custom_call.1} parent=1 // pred_region
      %137 = dma.done [#allocation6], 128
    $region29: #{tpu_custom_call.1} parent=1 // pred_fallthru
      _
    %138 = vsyncpa [#allocation5], 1
    %139 = vsyncpa [#allocation8], 1
    %140 = vsyncpa [#allocation6], 1

</llo_original>
